<compile_context>
chip_gen: v7x
topology: tpu7x:2x2x1
jax: 0.10.0
libtpu: 0.0.40
codegen_flags: <defaults>
</compile_context>

<pallas_src>
import functools

import jax
import jax.numpy as jnp
import numpy as np
from jax.experimental import pallas as pl
from jax.experimental.pallas import tpu as pltpu

_EPS = 1e-5
_SLOPE = 0.2


# ----------------------------- Pallas kernel ------------------------------ #
def _double_conv_kernel(x_ref, mask_ref, w1_ref, b1_ref, w2_ref, b2_ref, o_ref,
                        *, H, W):
    """One sample: (Conv3x3 + bias -> InstanceNorm -> LeakyReLU(0.2)) x 2.

    x_ref:    (1, Cin_p, PF)    zero-padded sample, spatially flattened
                                (PF = (H+2)*(W+2) + 2 slack zeros)
    mask_ref: (1, L)            1.0 on valid columns of the H x (W+2) grid
    w1_ref:   (Cout_p, 9*Cin_p) layer-1 weights, tap-major K
    b1_ref:   (Cout_p, 1)
    w2_ref:   (Cout_p, 9*Cout_p)
    b2_ref:   (Cout_p, 1)
    o_ref:    (1, Cout_p, L_pad)  L = H*(W+2), L_pad = round_up(L, 128)
    """
    Wp = W + 2
    L = H * Wp
    PF = x_ref.shape[2]
    Lp = o_ref.shape[2]
    inv_count = 1.0 / float(H * W)

    valid = mask_ref[...]                                  # (1, L) f32 {0,1}

    def conv_in_lrelu(src, w_ref, b_ref):
        # src: (C_in_layer, PF) zero-padded flat slab (f32, VMEM value)
        # tap (dy, dx) of the conv is the contiguous lane slice starting at
        # dy*(W+2)+dx -> single K = 9*C_in matmul on the MXU.
        taps = [src[:, dy * Wp + dx: dy * Wp + dx + L]
                for dy in range(3) for dx in range(3)]
        a = jnp.concatenate(taps, axis=0)                  # (9*C_in, L) im2col
        y = jnp.dot(w_ref[...], a, preferred_element_type=jnp.float32)
        y = y + b_ref[...]                                 # (C_out, L)

        # InstanceNorm2d (affine=False, eps=1e-5): one-pass masked stats over
        # the H*W valid columns only (junk columns contribute 0 to both sums).
        ym = y * valid
        s1 = jnp.sum(ym, axis=1, keepdims=True)
        s2 = jnp.sum(ym * ym, axis=1, keepdims=True)
        mean = s1 * inv_count
        var = s2 * inv_count - mean * mean                 # biased variance
        y = (y - mean) * jax.lax.rsqrt(var + _EPS)

        # LeakyReLU(0.2), then zero the junk columns: they land exactly on the
        # zero-padding positions of the next layer's slab.
        y = jnp.where(y >= 0, y, _SLOPE * y)
        return y * valid                                   # (C_out, L)

    c_out = w1_ref.shape[0]

    # ---------------- layer 1 ----------------
    x = x_ref[0].astype(jnp.float32)                       # (Cin_p, PF)
    y1 = conv_in_lrelu(x, w1_ref, b1_ref)                  # (Cout_p, L), VMEM

    # Re-embed y1 as layer 2's zero-padded flat slab: valid entry (y, x) moves
    # from index y*Wp + x to (y+1)*Wp + (x+1) = idx + Wp + 1, and the zeroed
    # junk columns already sit on the interior padding positions.
    lead = jnp.zeros((c_out, Wp + 1), jnp.float32)
    tail = jnp.zeros((c_out, PF - L - (Wp + 1)), jnp.float32)
    z = jnp.concatenate([lead, y1, tail], axis=1)          # (Cout_p, PF)

    # ---------------- layer 2 ----------------
    y2 = conv_in_lrelu(z, w2_ref, b2_ref)                  # (Cout_p, L)

    # Pad the lane axis to a multiple of 128 so the output store is unmasked.
    if Lp > L:
        y2 = jnp.concatenate(
            [y2, jnp.zeros((c_out, Lp - L), jnp.float32)], axis=1)
    o_ref[0] = y2.astype(o_ref.dtype)


# ------------------------------ host wrapper ------------------------------- #
@jax.jit
def inconv_forward(x_nchw, w1, b1, w2, b2):
    """inconv(in_ch, out_ch).forward(x): x NCHW, weights in PyTorch OIHW layout."""
    n, cin, h, w = x_nchw.shape
    cout = w1.shape[0]
    wp = w + 2
    L = h * wp                        # flat output grid (H rows of width W+2)
    l_pad = ((L + 127) // 128) * 128  # lane-dense output slab width
    pf = (h + 2) * wp + 2             # padded flat slab + 2 slack zeros

    # round channels up to a multiple of 8 (zero weights) so every sublane
    # concat / matmul operand in the kernel is tile-aligned.
    cin_p = ((cin + 7) // 8) * 8
    cout_p = ((cout + 7) // 8) * 8

    # one zero-padded copy of the input (channel pad + 1-pixel spatial halo),
    # flattened per (sample, channel) -- no 9x tap blow-up in HBM.
    xpad = jnp.pad(x_nchw, ((0, 0), (0, cin_p - cin), (1, 1), (1, 1)))
    xflat = xpad.reshape(n, cin_p, (h + 2) * wp)
    xflat = jnp.pad(xflat, ((0, 0), (0, 0), (0, pf - (h + 2) * wp)))

    # weights (Cout, Cin, 3, 3) OIHW -> (Cout_p, 9*Cin_p), K index = (dy*3+dx)*Cin_p + c
    w1p = jnp.pad(w1, ((0, cout_p - cout), (0, cin_p - cin), (0, 0), (0, 0)))
    w2p = jnp.pad(w2, ((0, cout_p - cout), (0, cout_p - cout), (0, 0), (0, 0)))
    w1k = jnp.transpose(w1p, (0, 2, 3, 1)).reshape(cout_p, 9 * cin_p)
    w2k = jnp.transpose(w2p, (0, 2, 3, 1)).reshape(cout_p, 9 * cout_p)
    b1c = jnp.pad(b1, (0, cout_p - cout)).reshape(cout_p, 1)
    b2c = jnp.pad(b2, (0, cout_p - cout)).reshape(cout_p, 1)

    # validity mask over the H x (W+2) flattened output grid
    mask = ((jnp.arange(L) % wp) < w).astype(jnp.float32).reshape(1, L)

    out = pl.pallas_call(
        functools.partial(_double_conv_kernel, H=h, W=w),
        out_shape=jax.ShapeDtypeStruct((n, cout_p, l_pad), x_nchw.dtype),
        grid_spec=pltpu.PrefetchScalarGridSpec(
            num_scalar_prefetch=0,
            grid=(n,),
            in_specs=[
                pl.BlockSpec((1, cin_p, pf), lambda i: (i, 0, 0)),
                pl.BlockSpec((1, L), lambda i: (0, 0)),
                pl.BlockSpec((cout_p, 9 * cin_p), lambda i: (0, 0)),
                pl.BlockSpec((cout_p, 1), lambda i: (0, 0)),
                pl.BlockSpec((cout_p, 9 * cout_p), lambda i: (0, 0)),
                pl.BlockSpec((cout_p, 1), lambda i: (0, 0)),
            ],
            out_specs=pl.BlockSpec((1, cout_p, l_pad), lambda i: (i, 0, 0)),
        ),
        compiler_params=pltpu.CompilerParams(
            dimension_semantics=("parallel",),   # v7x: shard samples over 2 TCs
        ),
    )(xflat, mask, w1k, b1c, w2k, b2c)

    # (N, Cout_p, L_pad) -> drop padding / junk columns / padded channels -> NCHW
    return out[:, :cout, :L].reshape(n, cout, h, wp)[:, :, :, :w]


# --------------------------- pure-JAX reference ---------------------------- #
def _ref_forward(x, w1, b1, w2, b2):
    def block(x, w, b):
        y = jax.lax.conv_general_dilated(
            x, w, window_strides=(1, 1), padding="SAME",
            dimension_numbers=("NCHW", "OIHW", "NCHW"),
        ) + b.reshape(1, -1, 1, 1)
        mean = jnp.mean(y, axis=(2, 3), keepdims=True)
        var = jnp.mean((y - mean) ** 2, axis=(2, 3), keepdims=True)
        y = (y - mean) * jax.lax.rsqrt(var + 1e-5)
        return jnp.where(y >= 0, y, 0.2 * y)

    return block(block(x, w1, b1), w2, b2)


# ---------------------------------- main ----------------------------------- #
if __name__ == "__main__":
    N, IN_CH, OUT_CH, H, W = 2, 4, 8, 16, 16

    key = jax.random.PRNGKey(0)
    kx, k1, k2, k3, k4 = jax.random.split(key, 5)

    x = jax.random.normal(kx, (N, IN_CH, H, W), dtype=jnp.float32)      # NCHW
    # PyTorch-layout parameters: conv weight OIHW, bias (Cout,)
    w1 = jax.random.normal(k1, (OUT_CH, IN_CH, 3, 3), dtype=jnp.float32) * 0.2
    b1 = jax.random.normal(k2, (OUT_CH,), dtype=jnp.float32) * 0.1
    w2 = jax.random.normal(k3, (OUT_CH, OUT_CH, 3, 3), dtype=jnp.float32) * 0.2
    b2 = jax.random.normal(k4, (OUT_CH,), dtype=jnp.float32) * 0.1

    out = jax.block_until_ready(inconv_forward(x, w1, b1, w2, b2))
    ref = jax.block_until_ready(_ref_forward(x, w1, b1, w2, b2))
    np.testing.assert_allclose(np.asarray(out), np.asarray(ref),
                               rtol=1e-4, atol=1e-4)

    print("KERNEL_OK")
</pallas_src>

<mosaic_0001>
module attributes {stable_mosaic.version = 11 : i64} {
  func.func @_double_conv_kernel(%arg0: i32, %arg1: memref<1x8x326xf32, #tpu.memory_space<vmem>>, %arg2: memref<1x288xf32, #tpu.memory_space<vmem>>, %arg3: memref<8x72xf32, #tpu.memory_space<vmem>>, %arg4: memref<8x1xf32, #tpu.memory_space<vmem>>, %arg5: memref<8x72xf32, #tpu.memory_space<vmem>>, %arg6: memref<8x1xf32, #tpu.memory_space<vmem>>, %arg7: memref<1x8x384xf32, #tpu.memory_space<vmem>>) attributes {dimension_semantics = [#tpu.dimension_semantics<parallel>], iteration_bounds = array<i64: 2>, scalar_prefetch = 0 : i64, scratch_operands = 0 : i64, tpu.core_type = #tpu.core_type<tc>, window_params = [{transform_indices = @transform_0, window_bounds = array<i64: 1, 8, 326>}, {pipeline_mode = #tpu.pipeline_mode<synchronous>, transform_indices = @transform_1, window_bounds = array<i64: 1, 288>}, {pipeline_mode = #tpu.pipeline_mode<synchronous>, transform_indices = @transform_2, window_bounds = array<i64: 8, 72>}, {pipeline_mode = #tpu.pipeline_mode<synchronous>, transform_indices = @transform_3, window_bounds = array<i64: 8, 1>}, {pipeline_mode = #tpu.pipeline_mode<synchronous>, transform_indices = @transform_4, window_bounds = array<i64: 8, 72>}, {pipeline_mode = #tpu.pipeline_mode<synchronous>, transform_indices = @transform_5, window_bounds = array<i64: 8, 1>}, {transform_indices = @transform_6, window_bounds = array<i64: 1, 8, 384>}]} {
    %c0 = arith.constant 0 : index
    %c0_0 = arith.constant 0 : index
    %0 = vector.load %arg2[%c0, %c0_0] : memref<1x288xf32, #tpu.memory_space<vmem>>, vector<1x288xf32>
    %c0_1 = arith.constant 0 : index
    %c0_2 = arith.constant 0 : index
    %c0_3 = arith.constant 0 : index
    %1 = vector.load %arg1[%c0_1, %c0_2, %c0_3] : memref<1x8x326xf32, #tpu.memory_space<vmem>>, vector<1x8x326xf32>
    %2 = vector.shape_cast %1 : vector<1x8x326xf32> to vector<8x326xf32>
    %3 = vector.extract_strided_slice %2 {offsets = [0, 0], sizes = [8, 288], strides = [1, 1]} : vector<8x326xf32> to vector<8x288xf32>
    %4 = vector.extract_strided_slice %2 {offsets = [0, 1], sizes = [8, 288], strides = [1, 1]} : vector<8x326xf32> to vector<8x288xf32>
    %5 = vector.extract_strided_slice %2 {offsets = [0, 2], sizes = [8, 288], strides = [1, 1]} : vector<8x326xf32> to vector<8x288xf32>
    %6 = vector.extract_strided_slice %2 {offsets = [0, 18], sizes = [8, 288], strides = [1, 1]} : vector<8x326xf32> to vector<8x288xf32>
    %7 = vector.extract_strided_slice %2 {offsets = [0, 19], sizes = [8, 288], strides = [1, 1]} : vector<8x326xf32> to vector<8x288xf32>
    %8 = vector.extract_strided_slice %2 {offsets = [0, 20], sizes = [8, 288], strides = [1, 1]} : vector<8x326xf32> to vector<8x288xf32>
    %9 = vector.extract_strided_slice %2 {offsets = [0, 36], sizes = [8, 288], strides = [1, 1]} : vector<8x326xf32> to vector<8x288xf32>
    %10 = vector.extract_strided_slice %2 {offsets = [0, 37], sizes = [8, 288], strides = [1, 1]} : vector<8x326xf32> to vector<8x288xf32>
    %11 = vector.extract_strided_slice %2 {offsets = [0, 38], sizes = [8, 288], strides = [1, 1]} : vector<8x326xf32> to vector<8x288xf32>
    %12 = tpu.concatenate %3, %4, %5, %6, %7, %8, %9, %10, %11 in 0 : vector<8x288xf32>, vector<8x288xf32>, vector<8x288xf32>, vector<8x288xf32>, vector<8x288xf32>, vector<8x288xf32>, vector<8x288xf32>, vector<8x288xf32>, vector<8x288xf32> -> vector<72x288xf32>
    %c0_4 = arith.constant 0 : index
    %c0_5 = arith.constant 0 : index
    %13 = vector.load %arg3[%c0_4, %c0_5] : memref<8x72xf32, #tpu.memory_space<vmem>>, vector<8x72xf32>
    %cst = arith.constant dense<0.000000e+00> : vector<8x288xf32>
    %14 = tpu.matmul %13, %12, %cst {dimension_numbers = #tpu.dot_dimension_numbers<[1], [0], [0], [1], [0, 0, 1, 1], [], []>} : vector<8x72xf32>, vector<72x288xf32>, vector<8x288xf32> -> vector<8x288xf32>
    %c0_6 = arith.constant 0 : index
    %c0_7 = arith.constant 0 : index
    %15 = vector.load %arg4[%c0_6, %c0_7] : memref<8x1xf32, #tpu.memory_space<vmem>>, vector<8x1xf32>
    %16 = vector.broadcast %15 : vector<8x1xf32> to vector<8x288xf32>
    %17 = arith.addf %14, %16 : vector<8x288xf32>
    %18 = vector.broadcast %0 : vector<1x288xf32> to vector<8x288xf32>
    %19 = arith.mulf %17, %18 : vector<8x288xf32>
    %cst_8 = arith.constant dense<0.000000e+00> : vector<8xf32>
    %20 = vector.multi_reduction <add>, %19, %cst_8 [1] : vector<8x288xf32> to vector<8xf32>
    %21 = vector.shape_cast %20 : vector<8xf32> to vector<8x1xf32>
    %22 = arith.mulf %19, %19 : vector<8x288xf32>
    %cst_9 = arith.constant dense<0.000000e+00> : vector<8xf32>
    %23 = vector.multi_reduction <add>, %22, %cst_9 [1] : vector<8x288xf32> to vector<8xf32>
    %24 = vector.shape_cast %23 : vector<8xf32> to vector<8x1xf32>
    %cst_10 = arith.constant 3.906250e-03 : f32
    %25 = vector.broadcast %cst_10 : f32 to vector<8x1xf32>
    %26 = arith.mulf %21, %25 : vector<8x1xf32>
    %cst_11 = arith.constant 3.906250e-03 : f32
    %27 = vector.broadcast %cst_11 : f32 to vector<8x1xf32>
    %28 = arith.mulf %24, %27 : vector<8x1xf32>
    %29 = arith.mulf %26, %26 : vector<8x1xf32>
    %30 = arith.subf %28, %29 : vector<8x1xf32>
    %31 = vector.broadcast %26 : vector<8x1xf32> to vector<8x288xf32>
    %32 = arith.subf %17, %31 : vector<8x288xf32>
    %cst_12 = arith.constant 9.99999974E-6 : f32
    %33 = vector.broadcast %cst_12 : f32 to vector<8x1xf32>
    %34 = arith.addf %30, %33 : vector<8x1xf32>
    %35 = math.rsqrt %34 : vector<8x1xf32>
    %36 = vector.broadcast %35 : vector<8x1xf32> to vector<8x288xf32>
    %37 = arith.mulf %32, %36 : vector<8x288xf32>
    %cst_13 = arith.constant 0.000000e+00 : f32
    %38 = vector.broadcast %cst_13 : f32 to vector<8x288xf32>
    %39 = arith.cmpf oge, %37, %38 : vector<8x288xf32>
    %cst_14 = arith.constant 2.000000e-01 : f32
    %40 = vector.broadcast %cst_14 : f32 to vector<8x288xf32>
    %41 = arith.mulf %40, %37 : vector<8x288xf32>
    %42 = arith.select %39, %37, %41 : vector<8x288xi1>, vector<8x288xf32>
    %43 = vector.broadcast %0 : vector<1x288xf32> to vector<8x288xf32>
    %44 = arith.mulf %42, %43 : vector<8x288xf32>
    %cst_15 = arith.constant 0.000000e+00 : f32
    %45 = vector.broadcast %cst_15 : f32 to vector<8x19xf32>
    %cst_16 = arith.constant 0.000000e+00 : f32
    %46 = vector.broadcast %cst_16 : f32 to vector<8x19xf32>
    %47 = tpu.concatenate %45, %44, %46 in 1 : vector<8x19xf32>, vector<8x288xf32>, vector<8x19xf32> -> vector<8x326xf32>
    %48 = vector.extract_strided_slice %47 {offsets = [0, 0], sizes = [8, 288], strides = [1, 1]} : vector<8x326xf32> to vector<8x288xf32>
    %49 = vector.extract_strided_slice %47 {offsets = [0, 1], sizes = [8, 288], strides = [1, 1]} : vector<8x326xf32> to vector<8x288xf32>
    %50 = vector.extract_strided_slice %47 {offsets = [0, 2], sizes = [8, 288], strides = [1, 1]} : vector<8x326xf32> to vector<8x288xf32>
    %51 = vector.extract_strided_slice %47 {offsets = [0, 18], sizes = [8, 288], strides = [1, 1]} : vector<8x326xf32> to vector<8x288xf32>
    %52 = vector.extract_strided_slice %47 {offsets = [0, 19], sizes = [8, 288], strides = [1, 1]} : vector<8x326xf32> to vector<8x288xf32>
    %53 = vector.extract_strided_slice %47 {offsets = [0, 20], sizes = [8, 288], strides = [1, 1]} : vector<8x326xf32> to vector<8x288xf32>
    %54 = vector.extract_strided_slice %47 {offsets = [0, 36], sizes = [8, 288], strides = [1, 1]} : vector<8x326xf32> to vector<8x288xf32>
    %55 = vector.extract_strided_slice %47 {offsets = [0, 37], sizes = [8, 288], strides = [1, 1]} : vector<8x326xf32> to vector<8x288xf32>
    %56 = vector.extract_strided_slice %47 {offsets = [0, 38], sizes = [8, 288], strides = [1, 1]} : vector<8x326xf32> to vector<8x288xf32>
    %57 = tpu.concatenate %48, %49, %50, %51, %52, %53, %54, %55, %56 in 0 : vector<8x288xf32>, vector<8x288xf32>, vector<8x288xf32>, vector<8x288xf32>, vector<8x288xf32>, vector<8x288xf32>, vector<8x288xf32>, vector<8x288xf32>, vector<8x288xf32> -> vector<72x288xf32>
    %c0_17 = arith.constant 0 : index
    %c0_18 = arith.constant 0 : index
    %58 = vector.load %arg5[%c0_17, %c0_18] : memref<8x72xf32, #tpu.memory_space<vmem>>, vector<8x72xf32>
    %cst_19 = arith.constant dense<0.000000e+00> : vector<8x288xf32>
    %59 = tpu.matmul %58, %57, %cst_19 {dimension_numbers = #tpu.dot_dimension_numbers<[1], [0], [0], [1], [0, 0, 1, 1], [], []>} : vector<8x72xf32>, vector<72x288xf32>, vector<8x288xf32> -> vector<8x288xf32>
    %c0_20 = arith.constant 0 : index
    %c0_21 = arith.constant 0 : index
    %60 = vector.load %arg6[%c0_20, %c0_21] : memref<8x1xf32, #tpu.memory_space<vmem>>, vector<8x1xf32>
    %61 = vector.broadcast %60 : vector<8x1xf32> to vector<8x288xf32>
    %62 = arith.addf %59, %61 : vector<8x288xf32>
    %63 = vector.broadcast %0 : vector<1x288xf32> to vector<8x288xf32>
    %64 = arith.mulf %62, %63 : vector<8x288xf32>
    %cst_22 = arith.constant dense<0.000000e+00> : vector<8xf32>
    %65 = vector.multi_reduction <add>, %64, %cst_22 [1] : vector<8x288xf32> to vector<8xf32>
    %66 = vector.shape_cast %65 : vector<8xf32> to vector<8x1xf32>
    %67 = arith.mulf %64, %64 : vector<8x288xf32>
    %cst_23 = arith.constant dense<0.000000e+00> : vector<8xf32>
    %68 = vector.multi_reduction <add>, %67, %cst_23 [1] : vector<8x288xf32> to vector<8xf32>
    %69 = vector.shape_cast %68 : vector<8xf32> to vector<8x1xf32>
    %cst_24 = arith.constant 3.906250e-03 : f32
    %70 = vector.broadcast %cst_24 : f32 to vector<8x1xf32>
    %71 = arith.mulf %66, %70 : vector<8x1xf32>
    %cst_25 = arith.constant 3.906250e-03 : f32
    %72 = vector.broadcast %cst_25 : f32 to vector<8x1xf32>
    %73 = arith.mulf %69, %72 : vector<8x1xf32>
    %74 = arith.mulf %71, %71 : vector<8x1xf32>
    %75 = arith.subf %73, %74 : vector<8x1xf32>
    %76 = vector.broadcast %71 : vector<8x1xf32> to vector<8x288xf32>
    %77 = arith.subf %62, %76 : vector<8x288xf32>
    %cst_26 = arith.constant 9.99999974E-6 : f32
    %78 = vector.broadcast %cst_26 : f32 to vector<8x1xf32>
    %79 = arith.addf %75, %78 : vector<8x1xf32>
    %80 = math.rsqrt %79 : vector<8x1xf32>
    %81 = vector.broadcast %80 : vector<8x1xf32> to vector<8x288xf32>
    %82 = arith.mulf %77, %81 : vector<8x288xf32>
    %cst_27 = arith.constant 0.000000e+00 : f32
    %83 = vector.broadcast %cst_27 : f32 to vector<8x288xf32>
    %84 = arith.cmpf oge, %82, %83 : vector<8x288xf32>
    %cst_28 = arith.constant 2.000000e-01 : f32
    %85 = vector.broadcast %cst_28 : f32 to vector<8x288xf32>
    %86 = arith.mulf %85, %82 : vector<8x288xf32>
    %87 = arith.select %84, %82, %86 : vector<8x288xi1>, vector<8x288xf32>
    %88 = vector.broadcast %0 : vector<1x288xf32> to vector<8x288xf32>
    %89 = arith.mulf %87, %88 : vector<8x288xf32>
    %cst_29 = arith.constant 0.000000e+00 : f32
    %90 = vector.broadcast %cst_29 : f32 to vector<8x96xf32>
    %91 = tpu.concatenate %89, %90 in 1 : vector<8x288xf32>, vector<8x96xf32> -> vector<8x384xf32>
    %c0_30 = arith.constant 0 : index
    %c0_31 = arith.constant 0 : index
    %c0_32 = arith.constant 0 : index
    %92 = vector.load %arg7[%c0_30, %c0_31, %c0_32] : memref<1x8x384xf32, #tpu.memory_space<vmem>>, vector<1x8x384xf32>
    %93 = vector.shape_cast %92 : vector<1x8x384xf32> to vector<8x384xf32>
    %94 = vector.shape_cast %91 : vector<8x384xf32> to vector<1x8x384xf32>
    tpu.vector_store %arg7[%c0_30, %c0_31, %c0_32], %94 {strides = array<i32>} : memref<1x8x384xf32, #tpu.memory_space<vmem>>, vector<1x8x384xf32>,
    return
  }
  func.func @transform_0(%arg0: i32) -> (i32, i32, i32) {
    %c0_i32 = arith.constant 0 : i32
    %c0_i32_0 = arith.constant 0 : i32
    %c0_i32_1 = arith.constant 0 : i32
    return %arg0, %c0_i32, %c0_i32_0 : i32, i32, i32
  }
  func.func @transform_1(%arg0: i32) -> (i32, i32) {
    %c0_i32 = arith.constant 0 : i32
    %c0_i32_0 = arith.constant 0 : i32
    %c0_i32_1 = arith.constant 0 : i32
    return %c0_i32, %c0_i32_0 : i32, i32
  }
  func.func @transform_2(%arg0: i32) -> (i32, i32) {
    %c0_i32 = arith.constant 0 : i32
    %c0_i32_0 = arith.constant 0 : i32
    %c0_i32_1 = arith.constant 0 : i32
    return %c0_i32, %c0_i32_0 : i32, i32
  }
  func.func @transform_3(%arg0: i32) -> (i32, i32) {
    %c0_i32 = arith.constant 0 : i32
    %c0_i32_0 = arith.constant 0 : i32
    %c0_i32_1 = arith.constant 0 : i32
    return %c0_i32, %c0_i32_0 : i32, i32
  }
  func.func @transform_4(%arg0: i32) -> (i32, i32) {
    %c0_i32 = arith.constant 0 : i32
    %c0_i32_0 = arith.constant 0 : i32
    %c0_i32_1 = arith.constant 0 : i32
    return %c0_i32, %c0_i32_0 : i32, i32
  }
  func.func @transform_5(%arg0: i32) -> (i32, i32) {
    %c0_i32 = arith.constant 0 : i32
    %c0_i32_0 = arith.constant 0 : i32
    %c0_i32_1 = arith.constant 0 : i32
    return %c0_i32, %c0_i32_0 : i32, i32
  }
  func.func @transform_6(%arg0: i32) -> (i32, i32, i32) {
    %c0_i32 = arith.constant 0 : i32
    %c0_i32_0 = arith.constant 0 : i32
    %c0_i32_1 = arith.constant 0 : i32
    return %arg0, %c0_i32, %c0_i32_0 : i32, i32, i32
  }
}

</mosaic_0001>

<llo_original>
// kernel: inconv_forward.1
$region0: #{inconv_forward.1}
  #allocation0 [shape = 'u32[]', space=smem, size = 0x4, offset = 0x4, fixed_abs, tag = 'smem constant byte address 0x4 - core index']
  #allocation1 [shape = 'u32[144,128]{1,0:T(1,128)}', space=vmem, size = 0x12000, scoped, tag = 'internal scratch']
  %s0 = inlined_call_operand.vmem [shape: f32[2,8,326], index: 0, kind: input, shape index: {}]
  %s1 = inlined_call_operand.vmem [shape: f32[1,288], index: 1, kind: input, shape index: {}]
  %s2 = inlined_call_operand.vmem [shape: f32[8,72], index: 2, kind: input, shape index: {}]
  %s3 = inlined_call_operand.vmem [shape: f32[8,1], index: 3, kind: input, shape index: {}]
  %s4 = inlined_call_operand.vmem [shape: f32[8,72], index: 4, kind: input, shape index: {}]
  %s5 = inlined_call_operand.vmem [shape: f32[8,1], index: 5, kind: input, shape index: {}]
  %s6 = inlined_call_operand.vmem [shape: f32[2,8,384], index: 6, kind: output, shape index: {}]
  %s7 = sld [smem:[#allocation0]]
  $region57: #{inconv_forward.1} parent=0
    _
  %s9 = ssub.s32 1, %s7
  %s10 = scalar_select 0, %s9, %s7
  loop: start=0, step=1, limit=4
  $region2: #{inconv_forward.1} parent=0 // loop_pre_header
    _
  $region3: #{inconv_forward.1} parent=0 // loop_header
    %s12 = sphi 0, %s16
    %p13 = scmp.ge.s32.totalorder %s12, 4
    %s22 = sphi 0, %s24
    %s25 = sphi 0, %s22
    %s26 = sphi 0, %s25
    %s42 = sphi 0, %s26
    %s46 = sphi 0, %s46
    %s48 = sphi 0, %s46
    %s49 = sphi 0, %s48
    %s63 = sphi 0, %s49
    %s67 = sphi 0, %s67
    %s69 = sphi 0, %s67
    %s70 = sphi 0, %s69
    %s84 = sphi 0, %s70
    %s88 = sphi 0, %s88
    %s90 = sphi 0, %s88
    %s91 = sphi 0, %s90
    %s105 = sphi 0, %s91
    %s109 = sphi 0, %s109
    %s111 = sphi 0, %s109
    %s112 = sphi 0, %s111
    %s126 = sphi 0, %s112
    %s130 = sphi 0, %s130
    %s132 = sphi 0, %s130
    %s133 = sphi 0, %s132
    %s147 = sphi 0, %s133
    %s153 = sphi 0, %s155
    %s156 = sphi 0, %s153
    %s157 = sphi 0, %s156
    %s173 = sphi 0, %s157
  $region4: #{inconv_forward.1} parent=0 // loop_header_branch
    %15 = sbr.rel (%p13) target = $region8
  $region5: #{inconv_forward.1} parent=0 // loop_body
    %s17 = ssub.s32 %s12, 1
    %s18 = ssub.s32 %s12, 2
    %s19 = sadd.s32 %s12, 1
    %s20 = ssub.s32 %s12, %s19
    %p21 = scmp.eq.s32.totalorder %s20, 0
    %s23 = sadd.s32 %s22, 1
    %s24 = scalar_select %p21, %s22, %s23
    %p27 = pneg %p21
    %p28 = scmp.eq.s32.totalorder %s12, 1
    %p29 = por %p27, %p28
    %p30 = scmp.ne.s32.totalorder %s22, %s25
    %p31 = scmp.eq.s32.totalorder %s12, 0
    %p32 = por %p30, %p31
    %p33 = scmp.ne.s32.totalorder %s22, %s25
    %p34 = scmp.eq.s32.totalorder %s17, 1
    %p35 = por %p33, %p34
    %p36 = scmp.ne.s32.totalorder %s25, %s26
    %p37 = scmp.eq.s32.totalorder %s17, 0
    %p38 = por %p36, %p37
    %p39 = scmp.ne.s32.totalorder %s25, %s26
    %p40 = scmp.eq.s32.totalorder %s18, 1
    %p41 = por %p39, %p40
    %p43 = scmp.ne.s32.totalorder %s26, %s42
    %p44 = scmp.eq.s32.totalorder %s18, 0
    %p45 = por %p43, %p44
    %s47 = sadd.s32 %s46, 1
    %p50 = scmp.eq.s32.totalorder %s12, 1
    %p51 = scmp.ne.s32.totalorder %s46, %s48
    %p52 = scmp.eq.s32.totalorder %s12, 0
    %p53 = por %p51, %p52
    %p54 = scmp.ne.s32.totalorder %s46, %s48
    %p55 = scmp.eq.s32.totalorder %s17, 1
    %p56 = por %p54, %p55
    %p57 = scmp.ne.s32.totalorder %s48, %s49
    %p58 = scmp.eq.s32.totalorder %s17, 0
    %p59 = por %p57, %p58
    %p60 = scmp.ne.s32.totalorder %s48, %s49
    %p61 = scmp.eq.s32.totalorder %s18, 1
    %p62 = por %p60, %p61
    %p64 = scmp.ne.s32.totalorder %s49, %s63
    %p65 = scmp.eq.s32.totalorder %s18, 0
    %p66 = por %p64, %p65
    %s68 = sadd.s32 %s67, 1
    %p71 = scmp.eq.s32.totalorder %s12, 1
    %p72 = scmp.ne.s32.totalorder %s67, %s69
    %p73 = scmp.eq.s32.totalorder %s12, 0
    %p74 = por %p72, %p73
    %p75 = scmp.ne.s32.totalorder %s67, %s69
    %p76 = scmp.eq.s32.totalorder %s17, 1
    %p77 = por %p75, %p76
    %p78 = scmp.ne.s32.totalorder %s69, %s70
    %p79 = scmp.eq.s32.totalorder %s17, 0
    %p80 = por %p78, %p79
    %p81 = scmp.ne.s32.totalorder %s69, %s70
    %p82 = scmp.eq.s32.totalorder %s18, 1
    %p83 = por %p81, %p82
    %p85 = scmp.ne.s32.totalorder %s70, %s84
    %p86 = scmp.eq.s32.totalorder %s18, 0
    %p87 = por %p85, %p86
    %s89 = sadd.s32 %s88, 1
    %p92 = scmp.eq.s32.totalorder %s12, 1
    %p93 = scmp.ne.s32.totalorder %s88, %s90
    %p94 = scmp.eq.s32.totalorder %s12, 0
    %p95 = por %p93, %p94
    %p96 = scmp.ne.s32.totalorder %s88, %s90
    %p97 = scmp.eq.s32.totalorder %s17, 1
    %p98 = por %p96, %p97
    %p99 = scmp.ne.s32.totalorder %s90, %s91
    %p100 = scmp.eq.s32.totalorder %s17, 0
    %p101 = por %p99, %p100
    %p102 = scmp.ne.s32.totalorder %s90, %s91
    %p103 = scmp.eq.s32.totalorder %s18, 1
    %p104 = por %p102, %p103
    %p106 = scmp.ne.s32.totalorder %s91, %s105
    %p107 = scmp.eq.s32.totalorder %s18, 0
    %p108 = por %p106, %p107
    %s110 = sadd.s32 %s109, 1
    %p113 = scmp.eq.s32.totalorder %s12, 1
    %p114 = scmp.ne.s32.totalorder %s109, %s111
    %p115 = scmp.eq.s32.totalorder %s12, 0
    %p116 = por %p114, %p115
    %p117 = scmp.ne.s32.totalorder %s109, %s111
    %p118 = scmp.eq.s32.totalorder %s17, 1
    %p119 = por %p117, %p118
    %p120 = scmp.ne.s32.totalorder %s111, %s112
    %p121 = scmp.eq.s32.totalorder %s17, 0
    %p122 = por %p120, %p121
    %p123 = scmp.ne.s32.totalorder %s111, %s112
    %p124 = scmp.eq.s32.totalorder %s18, 1
    %p125 = por %p123, %p124
    %p127 = scmp.ne.s32.totalorder %s112, %s126
    %p128 = scmp.eq.s32.totalorder %s18, 0
    %p129 = por %p127, %p128
    %s131 = sadd.s32 %s130, 1
    %p134 = scmp.eq.s32.totalorder %s12, 1
    %p135 = scmp.ne.s32.totalorder %s130, %s132
    %p136 = scmp.eq.s32.totalorder %s12, 0
    %p137 = por %p135, %p136
    %p138 = scmp.ne.s32.totalorder %s130, %s132
    %p139 = scmp.eq.s32.totalorder %s17, 1
    %p140 = por %p138, %p139
    %p141 = scmp.ne.s32.totalorder %s132, %s133
    %p142 = scmp.eq.s32.totalorder %s17, 0
    %p143 = por %p141, %p142
    %p144 = scmp.ne.s32.totalorder %s132, %s133
    %p145 = scmp.eq.s32.totalorder %s18, 1
    %p146 = por %p144, %p145
    %p148 = scmp.ne.s32.totalorder %s133, %s147
    %p149 = scmp.eq.s32.totalorder %s18, 0
    %p150 = por %p148, %p149
    %s151 = ssub.s32 %s12, %s19
    %p152 = scmp.eq.s32.totalorder %s151, 0
    %s154 = sadd.s32 %s153, 1
    %s155 = scalar_select %p152, %s153, %s154
    %p158 = pneg %p152
    %p159 = scmp.eq.s32.totalorder %s12, 1
    %p160 = por %p158, %p159
    %p161 = scmp.ne.s32.totalorder %s153, %s156
    %p162 = scmp.eq.s32.totalorder %s12, 0
    %p163 = por %p161, %p162
    %p164 = scmp.ne.s32.totalorder %s153, %s156
    %p165 = scmp.eq.s32.totalorder %s17, 1
    %p166 = por %p164, %p165
    %p167 = scmp.ne.s32.totalorder %s156, %s157
    %p168 = scmp.eq.s32.totalorder %s17, 0
    %p169 = por %p167, %p168
    %p170 = scmp.ne.s32.totalorder %s156, %s157
    %p171 = scmp.eq.s32.totalorder %s18, 1
    %p172 = por %p170, %p171
    %p174 = scmp.ne.s32.totalorder %s157, %s173
    %p175 = scmp.eq.s32.totalorder %s18, 0
    %p176 = por %p174, %p175
    %p177 = scmp.le.s32.totalorder 1, %s12
    %p178 = scmp.lt.s32.totalorder %s12, 3
    %p179 = pnand %p177, %p178
    %p180 = pneg %p179
    // Predicated region
    $region9: #{inconv_forward.1} parent=5 // pred_check
      _
    $region10: #{inconv_forward.1} parent=5 // pred_check_branch
      %182 = sbr.rel (%p179) target = $region12
    $region11: #{inconv_forward.1} parent=5 // pred_region
      %s183 = ssub.s32 %s12, 1
      // Predicated region
      $region13: #{inconv_forward.1} parent=11 // pred_check
        %p184 = pneg %p59
      $region14: #{inconv_forward.1} parent=11 // pred_check_branch
        %186 = sbr.rel (%p184) target = $region16
      $region15: #{inconv_forward.1} parent=11 // pred_region
        _
      $region16: #{inconv_forward.1} parent=11 // pred_fallthru
        _
      // Predicated region
      $region17: #{inconv_forward.1} parent=11 // pred_check
        %p187 = pneg %p80
      $region18: #{inconv_forward.1} parent=11 // pred_check_branch
        %189 = sbr.rel (%p187) target = $region20
      $region19: #{inconv_forward.1} parent=11 // pred_region
        _
      $region20: #{inconv_forward.1} parent=11 // pred_fallthru
        _
      // Predicated region
      $region21: #{inconv_forward.1} parent=11 // pred_check
        %p190 = pneg %p101
      $region22: #{inconv_forward.1} parent=11 // pred_check_branch
        %192 = sbr.rel (%p190) target = $region24
      $region23: #{inconv_forward.1} parent=11 // pred_region
        _
      $region24: #{inconv_forward.1} parent=11 // pred_fallthru
        _
      // Predicated region
      $region25: #{inconv_forward.1} parent=11 // pred_check
        %p193 = pneg %p122
      $region26: #{inconv_forward.1} parent=11 // pred_check_branch
        %195 = sbr.rel (%p193) target = $region28
      $region27: #{inconv_forward.1} parent=11 // pred_region
        _
      $region28: #{inconv_forward.1} parent=11 // pred_fallthru
        _
      // Predicated region
      $region29: #{inconv_forward.1} parent=11 // pred_check
        %p196 = pneg %p143
      $region30: #{inconv_forward.1} parent=11 // pred_check_branch
        %198 = sbr.rel (%p196) target = $region32
      $region31: #{inconv_forward.1} parent=11 // pred_region
        _
      $region32: #{inconv_forward.1} parent=11 // pred_fallthru
        _
    $region12: #{inconv_forward.1} parent=5 // pred_fallthru
      _
    %p199 = scmp.lt.s32.totalorder %s12, 2
    // Predicated region
    $region33: #{inconv_forward.1} parent=5 // pred_check
      %p200 = pneg %p199
    $region34: #{inconv_forward.1} parent=5 // pred_check_branch
      %202 = sbr.rel (%p200) target = $region36
    $region35: #{inconv_forward.1} parent=5 // pred_region
      // Predicated region
      $region37: #{inconv_forward.1} parent=35 // pred_check
        %p203 = pneg %p32
      $region38: #{inconv_forward.1} parent=35 // pred_check_branch
        %205 = sbr.rel (%p203) target = $region40
      $region39: #{inconv_forward.1} parent=35 // pred_region
        %p206 = scmp.lt.s32.totalorder %s12, 1
        %s207 = scalar_select %p206, %s12, 1
        %s208 = smul.addr %s207, 3
        %s209 = smul.addr %s208, 8
        %s210 = scalar_lea.vmem %s0, %s209
      $region40: #{inconv_forward.1} parent=35 // pred_fallthru
        _
    $region36: #{inconv_forward.1} parent=5 // pred_fallthru
      _
    %p211 = scmp.le.s32.totalorder 1, %s12
    %p212 = scmp.lt.s32.totalorder %s12, 3
    %p213 = pnand %p211, %p212
    %p214 = pneg %p213
    // Predicated region
    $region41: #{inconv_forward.1} parent=5 // pred_check
      _
    $region42: #{inconv_forward.1} parent=5 // pred_check_branch
      %216 = sbr.rel (%p213) target = $region44
    $region43: #{inconv_forward.1} parent=5 // pred_region
      %s217 = ssub.s32 %s12, 1
      %p218 = scmp.lt.s32.totalorder %s17, 1
      %s219 = scalar_select %p218, %s17, 1
      %s220 = smul.addr %s219, 3
      %s221 = smul.addr %s220, 8
      %s222 = scalar_lea.vmem %s0, %s221
      %p223 = pneg %p38
      %p224 = pneg %p35
      %p225 = pneg %p59
      %p226 = pneg %p56
      %p227 = pneg %p80
      %p228 = pneg %p77
      %p229 = pneg %p101
      %p230 = pneg %p98
      %p231 = pneg %p122
      %p232 = pneg %p119
      %p233 = pneg %p143
      %p234 = pneg %p140
      %p235 = pneg %p169
      %p236 = pneg %p166
      %p237 = scmp.lt.s32.totalorder %s17, 1
      %s238 = scalar_select %p237, %s17, 1
      %s239 = smul.addr %s238, 3
      %s240 = smul.addr %s239, 8
      %s241 = scalar_lea.vmem %s6, %s240
      %p242 = scmp.lt.s32.totalorder %s17, 1
      %s243 = scalar_select %p242, %s17, 1
      %s244 = smul.addr %s243, 3
      %s245 = smul.addr %s244, 8
      %s246 = scalar_lea.vmem %s0, %s245
      %p247 = scmp.lt.s32.totalorder %s17, 1
      %s248 = scalar_select %p247, %s17, 1
      %s249 = smul.addr %s248, 3
      %s250 = smul.addr %s249, 8
      %s251 = scalar_lea.vmem %s6, %s250
      %v252 = vld [vmem:[%s1] sm:$0x7]
      %v253 = vld [vmem:[%s246] sm:$0xff]
      %v254 = vld [vmem:[%s246 + $0x8] sm:$0xff]
      %v255 = vld [vmem:[%s246 + $0x10] sm:$0xff]
      %259 = vrot.lane.b32.xlu0 %v253, 127
      %v260 = vpop.permute.xlu0 %259
      %261 = vrot.lane.b32.xlu0 %v254, 127
      %v262 = vpop.permute.xlu0 %261
      %263 = vrot.lane.b32.xlu0 %v255, 127
      %v264 = vpop.permute.xlu0 %263
      %vm265 = vcmask 1039360
      %v266 = vsel %vm265, %v260, %v262
      %v267 = vsel %vm265, %v262, %v264
      %271 = vrot.lane.b32.xlu0 %v253, 126
      %v272 = vpop.permute.xlu0 %271
      %273 = vrot.lane.b32.xlu0 %v254, 126
      %v274 = vpop.permute.xlu0 %273
      %275 = vrot.lane.b32.xlu0 %v255, 126
      %v276 = vpop.permute.xlu0 %275
      %vm277 = vcmask 1031168
      %v278 = vsel %vm277, %v272, %v274
      %v279 = vsel %vm277, %v274, %v276
      %283 = vrot.lane.b32.xlu0 %v253, 110
      %v284 = vpop.permute.xlu0 %283
      %285 = vrot.lane.b32.xlu0 %v254, 110
      %v286 = vpop.permute.xlu0 %285
      %287 = vrot.lane.b32.xlu0 %v255, 110
      %v288 = vpop.permute.xlu0 %287
      %vm289 = vcmask 900096
      %v290 = vsel %vm289, %v284, %v286
      %v291 = vsel %vm289, %v286, %v288
      %295 = vrot.lane.b32.xlu0 %v253, 109
      %v296 = vpop.permute.xlu0 %295
      %297 = vrot.lane.b32.xlu0 %v254, 109
      %v298 = vpop.permute.xlu0 %297
      %299 = vrot.lane.b32.xlu0 %v255, 109
      %v300 = vpop.permute.xlu0 %299
      %vm301 = vcmask 891904
      %v302 = vsel %vm301, %v296, %v298
      %v303 = vsel %vm301, %v298, %v300
      %307 = vrot.lane.b32.xlu0 %v253, 108
      %v308 = vpop.permute.xlu0 %307
      %309 = vrot.lane.b32.xlu0 %v254, 108
      %v310 = vpop.permute.xlu0 %309
      %311 = vrot.lane.b32.xlu0 %v255, 108
      %v312 = vpop.permute.xlu0 %311
      %vm313 = vcmask 883712
      %v314 = vsel %vm313, %v308, %v310
      %v315 = vsel %vm313, %v310, %v312
      %319 = vrot.lane.b32.xlu0 %v253, 92
      %v320 = vpop.permute.xlu0 %319
      %321 = vrot.lane.b32.xlu0 %v254, 92
      %v322 = vpop.permute.xlu0 %321
      %323 = vrot.lane.b32.xlu0 %v255, 92
      %v324 = vpop.permute.xlu0 %323
      %vm325 = vcmask 752640
      %v326 = vsel %vm325, %v320, %v322
      %v327 = vsel %vm325, %v322, %v324
      %331 = vrot.lane.b32.xlu0 %v253, 91
      %v332 = vpop.permute.xlu0 %331
      %333 = vrot.lane.b32.xlu0 %v254, 91
      %v334 = vpop.permute.xlu0 %333
      %335 = vrot.lane.b32.xlu0 %v255, 91
      %v336 = vpop.permute.xlu0 %335
      %vm337 = vcmask 744448
      %v338 = vsel %vm337, %v332, %v334
      %v339 = vsel %vm337, %v334, %v336
      %343 = vrot.lane.b32.xlu0 %v253, 90
      %v344 = vpop.permute.xlu0 %343
      %345 = vrot.lane.b32.xlu0 %v254, 90
      %v346 = vpop.permute.xlu0 %345
      %347 = vrot.lane.b32.xlu0 %v255, 90
      %v348 = vpop.permute.xlu0 %347
      %vm349 = vcmask 736256
      %v350 = vsel %vm349, %v344, %v346
      %v351 = vsel %vm349, %v346, %v348
      %v355 = vld [vmem:[%s2] sm:$0xff]
      %v356 = vld [vmem:[%s3] sm:$0xff]
      %358 = vset.pattern.permute.xlu0 0
      %359 = vperm.xlu0 %358, %v356
      %v360 = vpop.permute.xlu0 %359
      %vm362 = vcmask 588800
      %v364 = vsel %vm362, %v355, 0
      %366 = vmatprep.subr.mxu0 %v254
      %367 = vmatpush1.msra.mxu0 %v253
      %368 = vmatprep.subr.mxu0 %v267
      %369 = vmatpush1.msra.mxu0 %v266
      %370 = vmatprep.subr.mxu0 %v279
      %371 = vmatpush1.msra.mxu0 %v278
      %372 = vmatprep.subr.mxu0 %v291
      %373 = vmatpush1.msra.mxu0 %v290
      %374 = vmatprep.subr.mxu0 %v303
      %375 = vmatpush1.msra.mxu0 %v302
      %376 = vmatprep.subr.mxu0 %v315
      %377 = vmatpush1.msra.mxu0 %v314
      %378 = vmatprep.subr.mxu0 %v327
      %379 = vmatpush1.msra.mxu0 %v326
      %380 = vmatprep.subr.mxu0 %v339
      %381 = vmatpush1.msra.mxu0 %v338
      %382 = vmatprep.subr.mxu0 %v351
      %383 = vmatpush1.msra.mxu0 %v350
      %384 = vmatprep.subr.mxu0 0.0
      %385 = vmatpush1.msra.mxu0 0.0
      %386 = vmatprep.subr.mxu0 0.0
      %387 = vmatpush1.msra.mxu0 0.0
      %388 = vmatprep.subr.mxu0 0.0
      %389 = vmatpush1.msra.mxu0 0.0
      %390 = vmatprep.subr.mxu0 0.0
      %391 = vmatpush1.msra.mxu0 0.0
      %392 = vmatprep.subr.mxu0 0.0
      %393 = vmatpush1.msra.mxu0 0.0
      %394 = vmatprep.subr.mxu0 0.0
      %395 = vmatpush1.msra.mxu0 0.0
      %396 = vmatprep.subr.mxu0 0.0
      %397 = vmatpush1.msra.mxu0 0.0
      %398 = vmatprep.subr.mxu0 0.0
      %399 = vmatpush1.msra.mxu0 0.0
      %400 = vmatprep.subr.mxu0 0.0
      %401 = vmatpush1.msra.mxu0 0.0
      %402 = vmatprep.subr.mxu0 0.0
      %403 = vmatpush1.msra.mxu0 0.0
      %404 = vmatprep.subr.mxu0 0.0
      %405 = vmatpush1.msra.mxu0 0.0
      %406 = vmatprep.subr.mxu0 0.0
      %407 = vmatpush1.msra.mxu0 0.0
      %408 = vmatprep.subr.mxu0 0.0
      %409 = vmatpush1.msra.mxu0 0.0
      %410 = vmatprep.subr.mxu0 0.0
      %411 = vmatpush1.msra.mxu0 0.0
      %412 = vmatprep.subr.mxu0 0.0
      %413 = vmatpush1.msra.mxu0 0.0
      %414 = vmatprep.subr.mxu0 0.0
      %415 = vmatpush1.msra.mxu0 0.0
      %416 = vmatprep.subr.mxu0 0.0
      %417 = vmatpush1.msra.mxu0 0.0
      %418 = vmatprep.subr.mxu0 0.0
      %419 = vmatpush1.msra.mxu0 0.0
      %420 = vmatprep.subr.mxu0 0.0
      %421 = vmatpush1.msra.mxu0 0.0
      %422 = vmatprep.subr.mxu0 0.0
      %423 = vmatpush1.msra.mxu0 0.0
      %424 = vmatprep.subr.mxu0 0.0
      %425 = vmatpush1.msra.mxu0 0.0
      %426 = vmatprep.subr.mxu0 0.0
      %427 = vmatpush1.msra.mxu0 0.0
      %428 = vmatprep.subr.mxu0 0.0
      %429 = vmatpush1.msra.mxu0 0.0
      %430 = vmatprep.mubr.f32.mxu0 0.0
      %431 = vmatmul.mubr.f32.gmra.mrb[0].mxu0 %v364
      %v432 = vpop.f32.mrb[0].mxu0
      %v433 = vadd.f32 %v360, %v432
      %v434 = vpop.f32.mrb[0].mxu0
      %v435 = vadd.f32 %v360, %v434
      %436 = vdwg.mxu0
      %437 = vmatprep.subr.mxu0 0.0
      %438 = vmatpush1.msra.mxu0 %v255
      %439 = vmatprep.subr.mxu0 0.0
      %440 = vmatpush1.msra.mxu0 %v264
      %441 = vmatprep.subr.mxu0 0.0
      %442 = vmatpush1.msra.mxu0 %v276
      %443 = vmatprep.subr.mxu0 0.0
      %444 = vmatpush1.msra.mxu0 %v288
      %445 = vmatprep.subr.mxu0 0.0
      %446 = vmatpush1.msra.mxu0 %v300
      %447 = vmatprep.subr.mxu0 0.0
      %448 = vmatpush1.msra.mxu0 %v312
      %449 = vmatprep.subr.mxu0 0.0
      %450 = vmatpush1.msra.mxu0 %v324
      %451 = vmatprep.subr.mxu0 0.0
      %452 = vmatpush1.msra.mxu0 %v336
      %453 = vmatprep.subr.mxu0 0.0
      %454 = vmatpush1.msra.mxu0 %v348
      %455 = vmatprep.subr.mxu0 0.0
      %456 = vmatpush1.msra.mxu0 0.0
      %457 = vmatprep.subr.mxu0 0.0
      %458 = vmatpush1.msra.mxu0 0.0
      %459 = vmatprep.subr.mxu0 0.0
      %460 = vmatpush1.msra.mxu0 0.0
      %461 = vmatprep.subr.mxu0 0.0
      %462 = vmatpush1.msra.mxu0 0.0
      %463 = vmatprep.subr.mxu0 0.0
      %464 = vmatpush1.msra.mxu0 0.0
      %465 = vmatprep.subr.mxu0 0.0
      %466 = vmatpush1.msra.mxu0 0.0
      %467 = vmatprep.subr.mxu0 0.0
      %468 = vmatpush1.msra.mxu0 0.0
      %469 = vmatprep.subr.mxu0 0.0
      %470 = vmatpush1.msra.mxu0 0.0
      %471 = vmatprep.subr.mxu0 0.0
      %472 = vmatpush1.msra.mxu0 0.0
      %473 = vmatprep.subr.mxu0 0.0
      %474 = vmatpush1.msra.mxu0 0.0
      %475 = vmatprep.subr.mxu0 0.0
      %476 = vmatpush1.msra.mxu0 0.0
      %477 = vmatprep.subr.mxu0 0.0
      %478 = vmatpush1.msra.mxu0 0.0
      %479 = vmatprep.subr.mxu0 0.0
      %480 = vmatpush1.msra.mxu0 0.0
      %481 = vmatprep.subr.mxu0 0.0
      %482 = vmatpush1.msra.mxu0 0.0
      %483 = vmatprep.subr.mxu0 0.0
      %484 = vmatpush1.msra.mxu0 0.0
      %485 = vmatprep.subr.mxu0 0.0
      %486 = vmatpush1.msra.mxu0 0.0
      %487 = vmatprep.subr.mxu0 0.0
      %488 = vmatpush1.msra.mxu0 0.0
      %489 = vmatprep.subr.mxu0 0.0
      %490 = vmatpush1.msra.mxu0 0.0
      %491 = vmatprep.subr.mxu0 0.0
      %492 = vmatpush1.msra.mxu0 0.0
      %493 = vmatprep.subr.mxu0 0.0
      %494 = vmatpush1.msra.mxu0 0.0
      %495 = vmatprep.subr.mxu0 0.0
      %496 = vmatpush1.msra.mxu0 0.0
      %497 = vmatprep.subr.mxu0 0.0
      %498 = vmatpush1.msra.mxu0 0.0
      %499 = vmatprep.subr.mxu0 0.0
      %500 = vmatpush1.msra.mxu0 0.0
      %501 = vmatprep.mubr.f32.mxu0 0.0
      %502 = vmatmul.mubr.f32.gmra.mrb[0].mxu0 %v364
      %v503 = vpop.f32.mrb[0].mxu0
      %v504 = vadd.f32 %v360, %v503
      %v505 = vpop.f32.mrb[0].mxu0
      %506 = vdwg.mxu0
      %v508 = vlaneseq
      %v509 = vshrl.u32 %v508, 7
      %v510 = vsub.s32 0, %v509
      %v511 = vrot.slane %v252, %v510
      %v512 = vlaneseq
      %v513 = vshrl.u32 %v512, 7
      %v514 = vsub.s32 1, %v513
      %v515 = vrot.slane %v252, %v514
      %v516 = vlaneseq
      %v517 = vshrl.u32 %v516, 7
      %v518 = vsub.s32 2, %v517
      %v519 = vrot.slane %v252, %v518
      %v523 = vmul.f32 %v433, %v511
      %v524 = vmul.f32 %v435, %v515
      %v525 = vmul.f32 %v504, %v519
      %v526 = vadd.f32 %v523, %v524
      %vm527 = vcmask 261120
      %v528 = vsel %vm527, %v525, 0.0
      %v529 = vadd.f32 %v526, %v528
      %530 = vadd.xlane.f32.xlu0 %v529
      %v531 = vpop.xlane.xlu0 %530
      %v532 = vmul.f32 %v523, %v523
      %v533 = vmul.f32 %v524, %v524
      %v534 = vmul.f32 %v525, %v525
      %v535 = vadd.f32 %v532, %v533
      %v536 = vsel %vm527, %v534, 0.0
      %v537 = vadd.f32 %v535, %v536
      %538 = vadd.xlane.f32.xlu0 %v537
      %v539 = vpop.xlane.xlu0 %538
      %v540 = vmul.f32 %v531, 0.00390625
      %v541 = vmul.f32 %v539, 0.00390625
      %v542 = vmul.f32 %v540, %v540
      %v543 = vsub.f32 %v541, %v542
      %v544 = vsub.f32 %v433, %v540
      %v545 = vsub.f32 %v435, %v540
      %v546 = vsub.f32 %v504, %v540
      %v547 = vadd.f32 %v543, 1e-05
      %v548 = vrsqrt.pop %v547
      %v549 = vmul.f32 %v544, %v548
      %v550 = vmul.f32 %v545, %v548
      %v551 = vmul.f32 %v546, %v548
      %vm552 = vcmp.ge.f32.partialorder %v549, 0.0
      %vm553 = vcmp.ge.f32.partialorder %v550, 0.0
      %vm554 = vcmp.ge.f32.partialorder %v551, 0.0
      %v555 = vmul.f32 %v549, 0.2
      %v556 = vmul.f32 %v550, 0.2
      %v557 = vmul.f32 %v551, 0.2
      %v558 = vsel %vm552, %v549, %v555
      %v559 = vsel %vm553, %v550, %v556
      %v560 = vsel %vm554, %v551, %v557
      %v561 = vmul.f32 %v558, %v511
      %v562 = vmul.f32 %v559, %v515
      %v563 = vmul.f32 %v560, %v519
      %567 = vrot.lane.b32.xlu0 %v561, 19
      %v568 = vpop.permute.xlu0 %567
      %569 = vrot.lane.b32.xlu0 %v562, 19
      %v570 = vpop.permute.xlu0 %569
      %571 = vrot.lane.b32.xlu0 %v563, 19
      %v572 = vpop.permute.xlu0 %571
      %vm573 = vcmask 154624
      %v574 = vsel %vm573, %v568, %v570
      %v575 = vsel %vm573, %v570, %v572
      %v579 = vsel %vm573, 0.0, %v568
      %vm580 = vcmask 416768
      %v581 = vsel %vm580, %v575, 0.0
      %584 = vrot.lane.b32.xlu0 %v579, 127
      %v585 = vpop.permute.xlu0 %584
      %586 = vrot.lane.b32.xlu0 %v574, 127
      %v587 = vpop.permute.xlu0 %586
      %588 = vrot.lane.b32.xlu0 %v581, 127
      %v589 = vpop.permute.xlu0 %588
      %v590 = vsel %vm265, %v585, %v587
      %v591 = vsel %vm265, %v587, %v589
      %595 = vrot.lane.b32.xlu0 %v579, 126
      %v596 = vpop.permute.xlu0 %595
      %597 = vrot.lane.b32.xlu0 %v574, 126
      %v598 = vpop.permute.xlu0 %597
      %599 = vrot.lane.b32.xlu0 %v581, 126
      %v600 = vpop.permute.xlu0 %599
      %v601 = vsel %vm277, %v596, %v598
      %v602 = vsel %vm277, %v598, %v600
      %606 = vrot.lane.b32.xlu0 %v579, 110
      %v607 = vpop.permute.xlu0 %606
      %608 = vrot.lane.b32.xlu0 %v574, 110
      %v609 = vpop.permute.xlu0 %608
      %610 = vrot.lane.b32.xlu0 %v581, 110
      %v611 = vpop.permute.xlu0 %610
      %v612 = vsel %vm289, %v607, %v609
      %v613 = vsel %vm289, %v609, %v611
      %617 = vrot.lane.b32.xlu0 %v579, 109
      %v618 = vpop.permute.xlu0 %617
      %619 = vrot.lane.b32.xlu0 %v574, 109
      %v620 = vpop.permute.xlu0 %619
      %621 = vrot.lane.b32.xlu0 %v581, 109
      %v622 = vpop.permute.xlu0 %621
      %v623 = vsel %vm301, %v618, %v620
      %v624 = vsel %vm301, %v620, %v622
      %628 = vrot.lane.b32.xlu0 %v579, 108
      %v629 = vpop.permute.xlu0 %628
      %630 = vrot.lane.b32.xlu0 %v574, 108
      %v631 = vpop.permute.xlu0 %630
      %632 = vrot.lane.b32.xlu0 %v581, 108
      %v633 = vpop.permute.xlu0 %632
      %v634 = vsel %vm313, %v629, %v631
      %v635 = vsel %vm313, %v631, %v633
      %639 = vrot.lane.b32.xlu0 %v579, 92
      %v640 = vpop.permute.xlu0 %639
      %641 = vrot.lane.b32.xlu0 %v574, 92
      %v642 = vpop.permute.xlu0 %641
      %643 = vrot.lane.b32.xlu0 %v581, 92
      %v644 = vpop.permute.xlu0 %643
      %v645 = vsel %vm325, %v640, %v642
      %v646 = vsel %vm325, %v642, %v644
      %650 = vrot.lane.b32.xlu0 %v579, 91
      %v651 = vpop.permute.xlu0 %650
      %652 = vrot.lane.b32.xlu0 %v574, 91
      %v653 = vpop.permute.xlu0 %652
      %654 = vrot.lane.b32.xlu0 %v581, 91
      %v655 = vpop.permute.xlu0 %654
      %v656 = vsel %vm337, %v651, %v653
      %v657 = vsel %vm337, %v653, %v655
      %661 = vrot.lane.b32.xlu0 %v579, 90
      %v662 = vpop.permute.xlu0 %661
      %663 = vrot.lane.b32.xlu0 %v574, 90
      %v664 = vpop.permute.xlu0 %663
      %665 = vrot.lane.b32.xlu0 %v581, 90
      %v666 = vpop.permute.xlu0 %665
      %v667 = vsel %vm349, %v662, %v664
      %v668 = vsel %vm349, %v664, %v666
      %v672 = vld [vmem:[%s4] sm:$0xff]
      %v673 = vld [vmem:[%s5] sm:$0xff]
      %675 = vset.pattern.permute.xlu0 0
      %676 = vperm.xlu0 %675, %v673
      %v677 = vpop.permute.xlu0 %676
      %v680 = vsel %vm362, %v672, 0
      %682 = vmatprep.subr.mxu0 %v574
      %683 = vmatpush1.msra.mxu0 %v579
      %684 = vmatprep.subr.mxu0 %v591
      %685 = vmatpush1.msra.mxu0 %v590
      %686 = vmatprep.subr.mxu0 %v602
      %687 = vmatpush1.msra.mxu0 %v601
      %688 = vmatprep.subr.mxu0 %v613
      %689 = vmatpush1.msra.mxu0 %v612
      %690 = vmatprep.subr.mxu0 %v624
      %691 = vmatpush1.msra.mxu0 %v623
      %692 = vmatprep.subr.mxu0 %v635
      %693 = vmatpush1.msra.mxu0 %v634
      %694 = vmatprep.subr.mxu0 %v646
      %695 = vmatpush1.msra.mxu0 %v645
      %696 = vmatprep.subr.mxu0 %v657
      %697 = vmatpush1.msra.mxu0 %v656
      %698 = vmatprep.subr.mxu0 %v668
      %699 = vmatpush1.msra.mxu0 %v667
      %700 = vmatprep.subr.mxu0 0.0
      %701 = vmatpush1.msra.mxu0 0.0
      %702 = vmatprep.subr.mxu0 0.0
      %703 = vmatpush1.msra.mxu0 0.0
      %704 = vmatprep.subr.mxu0 0.0
      %705 = vmatpush1.msra.mxu0 0.0
      %706 = vmatprep.subr.mxu0 0.0
      %707 = vmatpush1.msra.mxu0 0.0
      %708 = vmatprep.subr.mxu0 0.0
      %709 = vmatpush1.msra.mxu0 0.0
      %710 = vmatprep.subr.mxu0 0.0
      %711 = vmatpush1.msra.mxu0 0.0
      %712 = vmatprep.subr.mxu0 0.0
      %713 = vmatpush1.msra.mxu0 0.0
      %714 = vmatprep.subr.mxu0 0.0
      %715 = vmatpush1.msra.mxu0 0.0
      %716 = vmatprep.subr.mxu0 0.0
      %717 = vmatpush1.msra.mxu0 0.0
      %718 = vmatprep.subr.mxu0 0.0
      %719 = vmatpush1.msra.mxu0 0.0
      %720 = vmatprep.subr.mxu0 0.0
      %721 = vmatpush1.msra.mxu0 0.0
      %722 = vmatprep.subr.mxu0 0.0
      %723 = vmatpush1.msra.mxu0 0.0
      %724 = vmatprep.subr.mxu0 0.0
      %725 = vmatpush1.msra.mxu0 0.0
      %726 = vmatprep.subr.mxu0 0.0
      %727 = vmatpush1.msra.mxu0 0.0
      %728 = vmatprep.subr.mxu0 0.0
      %729 = vmatpush1.msra.mxu0 0.0
      %730 = vmatprep.subr.mxu0 0.0
      %731 = vmatpush1.msra.mxu0 0.0
      %732 = vmatprep.subr.mxu0 0.0
      %733 = vmatpush1.msra.mxu0 0.0
      %734 = vmatprep.subr.mxu0 0.0
      %735 = vmatpush1.msra.mxu0 0.0
      %736 = vmatprep.subr.mxu0 0.0
      %737 = vmatpush1.msra.mxu0 0.0
      %738 = vmatprep.subr.mxu0 0.0
      %739 = vmatpush1.msra.mxu0 0.0
      %740 = vmatprep.subr.mxu0 0.0
      %741 = vmatpush1.msra.mxu0 0.0
      %742 = vmatprep.subr.mxu0 0.0
      %743 = vmatpush1.msra.mxu0 0.0
      %744 = vmatprep.subr.mxu0 0.0
      %745 = vmatpush1.msra.mxu0 0.0
      %746 = vmatprep.mubr.f32.mxu0 0.0
      %747 = vmatmul.mubr.f32.gmra.mrb[0].mxu0 %v680
      %v748 = vpop.f32.mrb[0].mxu0
      %v749 = vadd.f32 %v677, %v748
      %v750 = vpop.f32.mrb[0].mxu0
      %v751 = vadd.f32 %v677, %v750
      %752 = vdwg.mxu0
      %753 = vmatprep.subr.mxu0 0.0
      %754 = vmatpush1.msra.mxu0 %v581
      %755 = vmatprep.subr.mxu0 0.0
      %756 = vmatpush1.msra.mxu0 %v589
      %757 = vmatprep.subr.mxu0 0.0
      %758 = vmatpush1.msra.mxu0 %v600
      %759 = vmatprep.subr.mxu0 0.0
      %760 = vmatpush1.msra.mxu0 %v611
      %761 = vmatprep.subr.mxu0 0.0
      %762 = vmatpush1.msra.mxu0 %v622
      %763 = vmatprep.subr.mxu0 0.0
      %764 = vmatpush1.msra.mxu0 %v633
      %765 = vmatprep.subr.mxu0 0.0
      %766 = vmatpush1.msra.mxu0 %v644
      %767 = vmatprep.subr.mxu0 0.0
      %768 = vmatpush1.msra.mxu0 %v655
      %769 = vmatprep.subr.mxu0 0.0
      %770 = vmatpush1.msra.mxu0 %v666
      %771 = vmatprep.subr.mxu0 0.0
      %772 = vmatpush1.msra.mxu0 0.0
      %773 = vmatprep.subr.mxu0 0.0
      %774 = vmatpush1.msra.mxu0 0.0
      %775 = vmatprep.subr.mxu0 0.0
      %776 = vmatpush1.msra.mxu0 0.0
      %777 = vmatprep.subr.mxu0 0.0
      %778 = vmatpush1.msra.mxu0 0.0
      %779 = vmatprep.subr.mxu0 0.0
      %780 = vmatpush1.msra.mxu0 0.0
      %781 = vmatprep.subr.mxu0 0.0
      %782 = vmatpush1.msra.mxu0 0.0
      %783 = vmatprep.subr.mxu0 0.0
      %784 = vmatpush1.msra.mxu0 0.0
      %785 = vmatprep.subr.mxu0 0.0
      %786 = vmatpush1.msra.mxu0 0.0
      %787 = vmatprep.subr.mxu0 0.0
      %788 = vmatpush1.msra.mxu0 0.0
      %789 = vmatprep.subr.mxu0 0.0
      %790 = vmatpush1.msra.mxu0 0.0
      %791 = vmatprep.subr.mxu0 0.0
      %792 = vmatpush1.msra.mxu0 0.0
      %793 = vmatprep.subr.mxu0 0.0
      %794 = vmatpush1.msra.mxu0 0.0
      %795 = vmatprep.subr.mxu0 0.0
      %796 = vmatpush1.msra.mxu0 0.0
      %797 = vmatprep.subr.mxu0 0.0
      %798 = vmatpush1.msra.mxu0 0.0
      %799 = vmatprep.subr.mxu0 0.0
      %800 = vmatpush1.msra.mxu0 0.0
      %801 = vmatprep.subr.mxu0 0.0
      %802 = vmatpush1.msra.mxu0 0.0
      %803 = vmatprep.subr.mxu0 0.0
      %804 = vmatpush1.msra.mxu0 0.0
      %805 = vmatprep.subr.mxu0 0.0
      %806 = vmatpush1.msra.mxu0 0.0
      %807 = vmatprep.subr.mxu0 0.0
      %808 = vmatpush1.msra.mxu0 0.0
      %809 = vmatprep.subr.mxu0 0.0
      %810 = vmatpush1.msra.mxu0 0.0
      %811 = vmatprep.subr.mxu0 0.0
      %812 = vmatpush1.msra.mxu0 0.0
      %813 = vmatprep.subr.mxu0 0.0
      %814 = vmatpush1.msra.mxu0 0.0
      %815 = vmatprep.subr.mxu0 0.0
      %816 = vmatpush1.msra.mxu0 0.0
      %817 = vmatprep.mubr.f32.mxu0 0.0
      %818 = vmatmul.mubr.f32.gmra.mrb[0].mxu0 %v680
      %v819 = vpop.f32.mrb[0].mxu0
      %v820 = vadd.f32 %v677, %v819
      %v821 = vpop.f32.mrb[0].mxu0
      %822 = vdwg.mxu0
      %v823 = vmul.f32 %v749, %v511
      %v824 = vmul.f32 %v751, %v515
      %v825 = vmul.f32 %v820, %v519
      %v826 = vadd.f32 %v823, %v824
      %v827 = vsel %vm527, %v825, 0.0
      %v828 = vadd.f32 %v826, %v827
      %829 = vadd.xlane.f32.xlu0 %v828
      %v830 = vpop.xlane.xlu0 %829
      %v831 = vmul.f32 %v823, %v823
      %v832 = vmul.f32 %v824, %v824
      %v833 = vmul.f32 %v825, %v825
      %v834 = vadd.f32 %v831, %v832
      %v835 = vsel %vm527, %v833, 0.0
      %v836 = vadd.f32 %v834, %v835
      %837 = vadd.xlane.f32.xlu0 %v836
      %v838 = vpop.xlane.xlu0 %837
      %v839 = vmul.f32 %v830, 0.00390625
      %v840 = vmul.f32 %v838, 0.00390625
      %v841 = vmul.f32 %v839, %v839
      %v842 = vsub.f32 %v840, %v841
      %v843 = vsub.f32 %v749, %v839
      %v844 = vsub.f32 %v751, %v839
      %v845 = vsub.f32 %v820, %v839
      %v846 = vadd.f32 %v842, 1e-05
      %v847 = vrsqrt.pop %v846
      %v848 = vmul.f32 %v843, %v847
      %v849 = vmul.f32 %v844, %v847
      %v850 = vmul.f32 %v845, %v847
      %vm851 = vcmp.ge.f32.partialorder %v848, 0.0
      %vm852 = vcmp.ge.f32.partialorder %v849, 0.0
      %vm853 = vcmp.ge.f32.partialorder %v850, 0.0
      %v854 = vmul.f32 %v848, 0.2
      %v855 = vmul.f32 %v849, 0.2
      %v856 = vmul.f32 %v850, 0.2
      %v857 = vsel %vm851, %v848, %v854
      %v858 = vsel %vm852, %v849, %v855
      %v859 = vsel %vm853, %v850, %v856
      %v860 = vmul.f32 %v857, %v511
      %v861 = vmul.f32 %v858, %v515
      %v862 = vmul.f32 %v859, %v519
      %v863 = vsel %vm527, %v862, 0.0
      %864 = vst [vmem:[%s251] sm:$0xff] %v860
      %865 = vst [vmem:[%s251 + $0x8] sm:$0xff] %v861
      %866 = vst [vmem:[%s251 + $0x10] sm:$0xff] %v863
      %p867 = scmp.lt.s32.totalorder %s17, 1
      %s868 = scalar_select %p867, %s17, 1
      %s869 = smul.addr %s868, 3
      %s870 = smul.addr %s869, 8
      %s871 = scalar_lea.vmem %s6, %s870
      // Predicated region
      $region45: #{inconv_forward.1} parent=43 // pred_check
        %p872 = pneg %p166
      $region46: #{inconv_forward.1} parent=43 // pred_check_branch
        %874 = sbr.rel (%p872) target = $region48
      $region47: #{inconv_forward.1} parent=43 // pred_region
        _
      $region48: #{inconv_forward.1} parent=43 // pred_fallthru
        _
    $region44: #{inconv_forward.1} parent=5 // pred_fallthru
      _
    %p875 = scmp.le.s32.totalorder 2, %s12
    // Predicated region
    $region49: #{inconv_forward.1} parent=5 // pred_check
      %p876 = pneg %p875
    $region50: #{inconv_forward.1} parent=5 // pred_check_branch
      %878 = sbr.rel (%p876) target = $region52
    $region51: #{inconv_forward.1} parent=5 // pred_region
      %s879 = ssub.s32 %s12, 2
      // Predicated region
      $region53: #{inconv_forward.1} parent=51 // pred_check
        %p880 = pneg %p172
      $region54: #{inconv_forward.1} parent=51 // pred_check_branch
        %882 = sbr.rel (%p880) target = $region56
      $region55: #{inconv_forward.1} parent=51 // pred_region
        %p883 = scmp.lt.s32.totalorder %s18, 1
        %s884 = scalar_select %p883, %s18, 1
        %s885 = smul.addr %s884, 3
        %s886 = smul.addr %s885, 8
        %s887 = scalar_lea.vmem %s6, %s886
      $region56: #{inconv_forward.1} parent=51 // pred_fallthru
        _
    $region52: #{inconv_forward.1} parent=5 // pred_fallthru
      _
  $region6: #{inconv_forward.1} parent=0 // loop_footer
    %s16 = sadd.s32 1, %s12
  $region7: #{inconv_forward.1} parent=0 // loop_footer_branch
    %11 = sbr.rel target = $region3
  $region8: #{inconv_forward.1} parent=0 // loop_exit
    _

</llo_original>
